<compile_context>
chip_gen: v7x
topology: tpu7x:2x2x1
jax: 0.10.0
libtpu: 0.0.40
codegen_flags: <defaults>
</compile_context>

<pallas_src>
import math
import functools

import jax
import jax.numpy as jnp
from jax import lax
from jax.experimental import pallas as pl
from jax.experimental.pallas import tpu as pltpu


def _round_up(x, m):
    return ((x + m - 1) // m) * m


def _pick_tile_rows(n_rows, tile, bytes_per_row, budget_bytes):
    """Sublane-aligned row tile: as big as possible for pipelining, >= 2 grid
    steps when possible (v7x megacore), and double-buffered blocks within the
    scoped-VMEM budget (re-derived for v7x's 64 MiB)."""
    t = min(tile, _round_up(n_rows, 8))
    if t >= n_rows and n_rows > 8:            # guarantee >= 2 grid steps
        t = _round_up((n_rows + 1) // 2, 8)
    while t > 8 and 2 * t * bytes_per_row > budget_bytes:
        t = _round_up(t // 2, 8)
    return t


def _pe_tables(d_model, d_pad):
    """Hoisted positional-embedding tables: (1, d_pad) inv_freq and phase rows.

    pe[pos, j] = sin(pos * inv_freq[j] + phase[j]) with
      inv_freq[j] = exp(-((j//2)*2) * ln(10000)/d_model),  phase[j] = (j%2)*pi/2
    (sin(x + pi/2) == cos(x), matching the PyTorch sin/cos interleave).
    """
    j = jnp.arange(d_pad)
    two_i = ((j // 2) * 2).astype(jnp.float32)
    inv_freq = jnp.exp(two_i * (-math.log(10000.0) / d_model))
    phase = (j % 2).astype(jnp.float32) * (math.pi / 2.0)
    return inv_freq[None, :], phase[None, :]


def _pe_block(shape, pos_start, inv_ref, phase_ref, seq_len=None):
    """pe rows for a (rows, d_pad) block starting at absolute row `pos_start`."""
    pos = lax.broadcasted_iota(jnp.int32, shape, 0) + pos_start
    if seq_len is not None:
        pos = pos % seq_len                   # flat (B*L) row -> position in [0, L)
    return jnp.sin(pos.astype(jnp.float32) * inv_ref[...] + phase_ref[...])


# ---------------------------------------------------------------------------
# TokenEmbedding: circular Conv1d(c_in -> d_model, k=3, bias=False) as one GEMM
# (optionally with the positional embedding fused into the epilogue)
# ---------------------------------------------------------------------------

def _token_embedding_kernel(x_ref, w_ref, inv_ref, phase_ref, o_ref, *,
                            seq_len, fuse_pe):
    # x_ref: (TM, 3*c_in) im2col rows; w_ref: (3*c_in, D_pad); o_ref: (TM, D_pad)
    acc = jnp.dot(x_ref[...], w_ref[...], preferred_element_type=jnp.float32)
    if fuse_pe:
        tm = o_ref.shape[0]
        m0 = pl.program_id(0) * tm
        acc = acc + _pe_block(acc.shape, m0, inv_ref, phase_ref, seq_len=seq_len)
    o_ref[...] = acc.astype(o_ref.dtype)


def token_embedding(x_ncl, weight_ock, *, tile_m=1024, add_positional=False):
    """x_ncl: [B, c_in, L] (PyTorch NCL); weight_ock: [d_model, c_in, 3].

    Returns [B, L, d_model] (TokenEmbedding.forward output; if add_positional,
    the PositionalEmbedding rows are added in the GEMM epilogue).
    """
    B, c_in, L = x_ncl.shape
    d_model = weight_ock.shape[0]
    K = 3 * c_in
    D_pad = _round_up(d_model, 128)           # lane-dense output guardrail
    itemsize = jnp.dtype(x_ncl.dtype).itemsize

    # im2col (fused wrapper glue): channels-last + circular pad + stack 3 taps.
    # NOTE: for very wide c_in (e.g. 321) the 3x duplication could instead be
    # avoided by keeping x as [M, c_in] and accumulating three shifted dots
    # in-kernel; negligible for typical Informer c_in (4-7).
    x_blc = jnp.transpose(x_ncl, (0, 2, 1))                          # [B, L, c_in]
    x_pad = jnp.concatenate([x_blc[:, -1:, :], x_blc, x_blc[:, :1, :]], axis=1)
    x_col = jnp.concatenate([x_pad[:, k:k + L, :] for k in range(3)], axis=-1)
    x_col = x_col.reshape(B * L, K)                                  # [M, 3*c_in]

    # Weight as [3*c_in, D_pad], matching x_col's (tap, channel) column order.
    w = jnp.transpose(weight_ock, (2, 1, 0)).reshape(K, d_model)
    if D_pad != d_model:
        w = jnp.pad(w, ((0, 0), (0, D_pad - d_model)))

    inv_row, phase_row = _pe_tables(d_model, D_pad)                  # (1, D_pad) f32

    M = B * L
    budget = 40 * 1024 * 1024                 # leaves headroom within v7x's 64 MiB
    TM = _pick_tile_rows(M, tile_m, (K + D_pad) * itemsize, budget)
    M_pad = _round_up(M, TM)
    if M_pad != M:
        x_col = jnp.pad(x_col, ((0, M_pad - M), (0, 0)))

    vmem_bytes = (2 * TM * K * itemsize          # x blocks (double-buffered)
                  + 2 * K * D_pad * itemsize     # resident weight (dbl-buffered)
                  + 2 * TM * D_pad * itemsize    # output blocks
                  + 4 * D_pad * 4                # inv_freq + phase rows
                  + (2 << 20))                   # headroom
    vmem_bytes = int(min(max(vmem_bytes, 8 << 20), 64 << 20))

    cost = pl.CostEstimate(
        flops=2 * M_pad * K * D_pad,
        transcendentals=M_pad * D_pad if add_positional else 0,
        bytes_accessed=(M_pad * K + K * D_pad + M_pad * D_pad) * itemsize)

    out = pl.pallas_call(
        functools.partial(_token_embedding_kernel, seq_len=L, fuse_pe=add_positional),
        out_shape=jax.ShapeDtypeStruct((M_pad, D_pad), x_ncl.dtype),
        grid_spec=pltpu.PrefetchScalarGridSpec(
            num_scalar_prefetch=0,
            grid=(M_pad // TM,),
            in_specs=[
                pl.BlockSpec((TM, K), lambda m: (m, 0)),
                pl.BlockSpec((K, D_pad), lambda m: (0, 0)),      # resident weight
                pl.BlockSpec((1, D_pad), lambda m: (0, 0)),      # inv_freq row
                pl.BlockSpec((1, D_pad), lambda m: (0, 0)),      # phase row
            ],
            out_specs=pl.BlockSpec((TM, D_pad), lambda m: (m, 0)),
        ),
        compiler_params=pltpu.CompilerParams(
            dimension_semantics=("parallel",),
            vmem_limit_bytes=vmem_bytes),
        cost_estimate=cost,
    )(x_col, w, inv_row, phase_row)
    return out[:M, :d_model].reshape(B, L, d_model)


# ---------------------------------------------------------------------------
# PositionalEmbedding: store-bound kernel (single sin, hoisted frequency table)
# ---------------------------------------------------------------------------

def _positional_embedding_kernel(inv_ref, phase_ref, o_ref):
    p0 = pl.program_id(0) * o_ref.shape[0]
    o_ref[...] = _pe_block(o_ref.shape, p0, inv_ref, phase_ref).astype(o_ref.dtype)


def positional_embedding(seq_len, d_model, dtype=jnp.float32, *, tile_p=1024):
    """Returns pe[:seq_len] with shape [seq_len, d_model] (d_model even)."""
    D_pad = _round_up(d_model, 128)
    itemsize = jnp.dtype(dtype).itemsize
    TP = _pick_tile_rows(seq_len, tile_p, D_pad * itemsize, 40 * 1024 * 1024)
    L_pad = _round_up(seq_len, TP)
    inv_row, phase_row = _pe_tables(d_model, D_pad)
    vmem_bytes = int(min(max(2 * TP * D_pad * itemsize + (2 << 20), 8 << 20), 64 << 20))
    pe = pl.pallas_call(
        _positional_embedding_kernel,
        out_shape=jax.ShapeDtypeStruct((L_pad, D_pad), dtype),
        grid_spec=pltpu.PrefetchScalarGridSpec(
            num_scalar_prefetch=0,
            grid=(L_pad // TP,),
            in_specs=[pl.BlockSpec((1, D_pad), lambda p: (0, 0)),
                      pl.BlockSpec((1, D_pad), lambda p: (0, 0))],
            out_specs=pl.BlockSpec((TP, D_pad), lambda p: (p, 0)),
        ),
        compiler_params=pltpu.CompilerParams(
            dimension_semantics=("parallel",),
            vmem_limit_bytes=vmem_bytes),
    )(inv_row, phase_row)
    return pe[:seq_len, :d_model]


# ---------------------------------------------------------------------------
# DataEmbedding.forward: pe expanded over batch + dropout (identity in eval)
# Writes the (B, L, d_model) result directly from the kernel (no pe
# materialization + broadcast_to round-trip through HBM).
# ---------------------------------------------------------------------------

def _data_embedding_kernel(inv_ref, phase_ref, o_ref):
    # o_ref block: (1, TP, D_pad); pe rows depend only on the position tile.
    shape = (o_ref.shape[1], o_ref.shape[2])
    p0 = pl.program_id(1) * o_ref.shape[1]
    o_ref[0] = _pe_block(shape, p0, inv_ref, phase_ref).astype(o_ref.dtype)


def data_embedding(x, d_model, *, tile_p=1024):
    """Matches DataEmbedding.forward: dropout(pe[:, :x.size(-1)].expand(B,-1,-1))."""
    B = x.shape[0]
    L = x.shape[-1]
    D_pad = _round_up(d_model, 128)
    TP = min(tile_p, _round_up(L, 8))
    if B == 1 and TP >= L and L > 8:          # keep >= 2 grid steps (v7x megacore)
        TP = _round_up((L + 1) // 2, 8)
    L_pad = _round_up(L, TP)
    inv_row, phase_row = _pe_tables(d_model, D_pad)
    vmem_bytes = int(min(max(2 * TP * D_pad * 4 + (2 << 20), 8 << 20), 64 << 20))
    out = pl.pallas_call(
        _data_embedding_kernel,
        out_shape=jax.ShapeDtypeStruct((B, L_pad, D_pad), jnp.float32),
        grid_spec=pltpu.PrefetchScalarGridSpec(
            num_scalar_prefetch=0,
            grid=(B, L_pad // TP),
            in_specs=[pl.BlockSpec((1, D_pad), lambda b, p: (0, 0)),
                      pl.BlockSpec((1, D_pad), lambda b, p: (0, 0))],
            out_specs=pl.BlockSpec((1, TP, D_pad), lambda b, p: (b, p, 0)),
        ),
        compiler_params=pltpu.CompilerParams(
            dimension_semantics=("parallel", "parallel"),
            vmem_limit_bytes=vmem_bytes),
    )(inv_row, phase_row)
    # TODO(synk): nn.Dropout is treated as identity (eval/inference mode); training-mode
    # dropout would require pltpu.prng_seed/prng_random_bits inside the kernel.
    if L_pad != L or D_pad != d_model:
        out = out[:, :L, :d_model]
    return out


def init_conv_weight(key, c_in, d_model):
    """Deterministic kaiming_normal_(mode='fan_in', nonlinearity='leaky_relu')."""
    fan_in = c_in * 3
    negative_slope = 0.01
    gain = math.sqrt(2.0 / (1.0 + negative_slope ** 2))
    std = gain / math.sqrt(fan_in)
    return std * jax.random.normal(key, (d_model, c_in, 3), dtype=jnp.float32)


if __name__ == "__main__":
    key = jax.random.PRNGKey(0)
    k_w, k_x = jax.random.split(key)

    B, c_in, L, d_model = 2, 4, 16, 32

    x = jax.random.normal(k_x, (B, c_in, L), dtype=jnp.float32)      # [B, c_in, L]
    weight = init_conv_weight(k_w, c_in, d_model)                    # [d_model, c_in, 3]

    # --- DataEmbedding.forward (the module's actual forward) ---
    y = jax.block_until_ready(data_embedding(x, d_model))
    assert y.shape == (B, L, d_model)

    # Plain-JAX reference for the positional embedding table.
    pos = jnp.arange(L, dtype=jnp.float32)[:, None]
    div_term = jnp.exp(jnp.arange(0, d_model, 2, dtype=jnp.float32)
                       * (-math.log(10000.0) / d_model))
    pe_ref = jnp.zeros((L, d_model), jnp.float32)
    pe_ref = pe_ref.at[:, 0::2].set(jnp.sin(pos * div_term))
    pe_ref = pe_ref.at[:, 1::2].set(jnp.cos(pos * div_term))
    assert jnp.allclose(y, jnp.broadcast_to(pe_ref[None], (B, L, d_model)),
                        atol=1e-4, rtol=1e-4)

    # --- PositionalEmbedding submodule kernel ---
    pe = jax.block_until_ready(positional_embedding(L, d_model))
    assert pe.shape == (L, d_model)
    assert jnp.allclose(pe, pe_ref, atol=1e-4, rtol=1e-4)

    # --- TokenEmbedding (value_embedding) single-GEMM kernel ---
    tv = jax.block_until_ready(token_embedding(x, weight))
    x_pad_ref = jnp.concatenate([x[:, :, -1:], x, x[:, :, :1]], axis=2)   # [B,c_in,L+2]
    tv_ref = jnp.einsum(
        "bckl,ock->blo",
        jnp.stack([x_pad_ref[:, :, k:k + L] for k in range(3)], axis=2),  # [B,c_in,3,L]
        weight)
    assert tv.shape == (B, L, d_model)
    assert jnp.allclose(tv, tv_ref, atol=1e-4, rtol=1e-4)

    # --- TokenEmbedding with the positional add fused into the GEMM epilogue ---
    tv_pe = jax.block_until_ready(token_embedding(x, weight, add_positional=True))
    assert jnp.allclose(tv_pe, tv_ref + pe_ref[None], atol=1e-4, rtol=1e-4)

    print("KERNEL_OK")
</pallas_src>

<mosaic_0001>
module attributes {stable_mosaic.version = 11 : i64} {
  func.func @_data_embedding_kernel(%arg0: i32, %arg1: i32, %arg2: memref<1x128xf32, #tpu.memory_space<vmem>>, %arg3: memref<1x128xf32, #tpu.memory_space<vmem>>, %arg4: memref<1x16x128xf32, #tpu.memory_space<vmem>>) attributes {dimension_semantics = [#tpu.dimension_semantics<parallel>, #tpu.dimension_semantics<parallel>], iteration_bounds = array<i64: 2, 1>, scalar_prefetch = 0 : i64, scratch_operands = 0 : i64, tpu.core_type = #tpu.core_type<tc>, window_params = [{pipeline_mode = #tpu.pipeline_mode<synchronous>, transform_indices = @transform_0, window_bounds = array<i64: 1, 128>}, {pipeline_mode = #tpu.pipeline_mode<synchronous>, transform_indices = @transform_1, window_bounds = array<i64: 1, 128>}, {transform_indices = @transform_2, window_bounds = array<i64: 1, 16, 128>}]} {
    %c16_i32 = arith.constant 16 : i32
    %0 = arith.muli %arg1, %c16_i32 : i32
    %1 = tpu.iota {dimensions = array<i32: 0>} : vector<16x128xi32>
    %2 = vector.broadcast %0 : i32 to vector<16x128xi32>
    %3 = arith.addi %1, %2 : vector<16x128xi32>
    %4 = arith.sitofp %3 : vector<16x128xi32> to vector<16x128xf32>
    %c0 = arith.constant 0 : index
    %c0_0 = arith.constant 0 : index
    %5 = vector.load %arg2[%c0, %c0_0] : memref<1x128xf32, #tpu.memory_space<vmem>>, vector<1x128xf32>
    %6 = vector.broadcast %5 : vector<1x128xf32> to vector<16x128xf32>
    %7 = arith.mulf %4, %6 : vector<16x128xf32>
    %c0_1 = arith.constant 0 : index
    %c0_2 = arith.constant 0 : index
    %8 = vector.load %arg3[%c0_1, %c0_2] : memref<1x128xf32, #tpu.memory_space<vmem>>, vector<1x128xf32>
    %9 = vector.broadcast %8 : vector<1x128xf32> to vector<16x128xf32>
    %10 = arith.addf %7, %9 : vector<16x128xf32>
    %11 = math.sin %10 : vector<16x128xf32>
    %c0_3 = arith.constant 0 : index
    %c0_4 = arith.constant 0 : index
    %c0_5 = arith.constant 0 : index
    %12 = vector.load %arg4[%c0_3, %c0_4, %c0_5] : memref<1x16x128xf32, #tpu.memory_space<vmem>>, vector<1x16x128xf32>
    %13 = vector.shape_cast %12 : vector<1x16x128xf32> to vector<16x128xf32>
    %14 = vector.shape_cast %11 : vector<16x128xf32> to vector<1x16x128xf32>
    tpu.vector_store %arg4[%c0_3, %c0_4, %c0_5], %14 {strides = array<i32>} : memref<1x16x128xf32, #tpu.memory_space<vmem>>, vector<1x16x128xf32>,
    return
  }
  func.func @transform_0(%arg0: i32, %arg1: i32) -> (i32, i32) {
    %c0_i32 = arith.constant 0 : i32
    %c0_i32_0 = arith.constant 0 : i32
    %c0_i32_1 = arith.constant 0 : i32
    return %c0_i32, %c0_i32_0 : i32, i32
  }
  func.func @transform_1(%arg0: i32, %arg1: i32) -> (i32, i32) {
    %c0_i32 = arith.constant 0 : i32
    %c0_i32_0 = arith.constant 0 : i32
    %c0_i32_1 = arith.constant 0 : i32
    return %c0_i32, %c0_i32_0 : i32, i32
  }
  func.func @transform_2(%arg0: i32, %arg1: i32) -> (i32, i32, i32) {
    %c0_i32 = arith.constant 0 : i32
    %c0_i32_0 = arith.constant 0 : i32
    return %arg0, %arg1, %c0_i32 : i32, i32, i32
  }
}

</mosaic_0001>

<llo_original>
// kernel: tpu_custom_call.1
$region0: #{tpu_custom_call.1}
  #allocation0 [shape = 'u32[]', space=smem, size = 0x4, offset = 0x4, fixed_abs, tag = 'smem constant byte address 0x4 - core index']
  #allocation1 [shape = 'u32[144,128]{1,0:T(1,128)}', space=vmem, size = 0x12000, scoped, tag = 'internal scratch']
  %s0 = inlined_call_operand.hbm [shape: f32[1,128], index: 0, kind: input, shape index: {}]
  %s1 = inlined_call_operand.vmem [shape: f32[1,128], index: 1, kind: input, shape index: {}]
  %s2 = inlined_call_operand.hbm [shape: f32[2,16,128], index: 2, kind: output, shape index: {}]
  %s3 = sld [smem:[#allocation0]]
  $region45: #{tpu_custom_call.1} parent=0
    _
  %s5 = ssub.s32 1, %s3
  %s6 = scalar_select 0, %s5, %s3
  $region1: #{tpu_custom_call.1} parent=0
    #allocation2 [shape = 'u8[512]{0}', space=vmem, size = 0x400, scoped, tag = 'input window, operand 0, single buffered']
    #allocation3 [shape = 's32[2]{0}', space=sflag, size = 0x8, scoped, tag = 'scoped memory for tpu_custom_call.1']
    #allocation4 [shape = 's32[2]{0}', space=sflag, size = 0x8, scoped, tag = 'scoped memory for tpu_custom_call.1']
    #allocation5 [shape = 'u8[16384]{0}', space=vmem, size = 0x4000, scoped, tag = 'output window, operand 0']
    %7 = vsyncpa [#allocation3], 0
    %8 = vsyncpa [#allocation4], 0
    %s9 = scalar_lea.sflag [#allocation4], 1
    %10 = vsyncpa %s9, 0
    loop: start=0, step=1, limit=4
    $region2: #{tpu_custom_call.1} parent=1 // loop_pre_header
      _
    $region3: #{tpu_custom_call.1} parent=1 // loop_header
      %s12 = sphi 0, %s16
      %p13 = scmp.ge.s32.totalorder %s12, 4
      %s19 = sphi 0, %s31
      %s20 = sphi 0, %s27
      %s21 = sphi 0, %s19
      %s22 = sphi 0, %s20
      %s23 = sphi 0, %s21
      %s24 = sphi 0, %s22
      %s32 = sphi 0, %s32
      %s34 = sphi 0, %s32
      %s35 = sphi 0, %s34
      %s49 = sphi 0, %s35
      %s53 = sphi 0, %s53
      %s55 = sphi 0, %s53
      %s56 = sphi 0, %s55
      %s70 = sphi 0, %s56
      %s78 = sphi 0, %s80
      %s81 = sphi 0, %s78
      %s82 = sphi 0, %s81
      %s98 = sphi 0, %s82
    $region4: #{tpu_custom_call.1} parent=1 // loop_header_branch
      %15 = sbr.rel (%p13) target = $region8
    $region5: #{tpu_custom_call.1} parent=1 // loop_body
      %s17 = ssub.s32 %s12, 1
      %s18 = ssub.s32 %s12, 2
      %s25 = sadd.s32 1, %s20
      %p26 = scmp.ge.s32.totalorder %s25, 1
      %s27 = scalar_select %p26, 0, %s25
      %s28 = sadd.s32 1, %s19
      %s29 = scalar_select %p26, %s28, %s19
      %p30 = scmp.ge.s32.totalorder %s29, 2
      %s31 = scalar_select %p30, 0, %s29
      %s33 = sadd.s32 %s32, 1
      %p36 = scmp.eq.s32.totalorder %s12, 1
      %p37 = scmp.ne.s32.totalorder %s32, %s34
      %p38 = scmp.eq.s32.totalorder %s12, 0
      %p39 = por %p37, %p38
      %p40 = scmp.ne.s32.totalorder %s32, %s34
      %p41 = scmp.eq.s32.totalorder %s17, 1
      %p42 = por %p40, %p41
      %p43 = scmp.ne.s32.totalorder %s34, %s35
      %p44 = scmp.eq.s32.totalorder %s17, 0
      %p45 = por %p43, %p44
      %p46 = scmp.ne.s32.totalorder %s34, %s35
      %p47 = scmp.eq.s32.totalorder %s18, 1
      %p48 = por %p46, %p47
      %p50 = scmp.ne.s32.totalorder %s35, %s49
      %p51 = scmp.eq.s32.totalorder %s18, 0
      %p52 = por %p50, %p51
      %s54 = sadd.s32 %s53, 1
      %p57 = scmp.eq.s32.totalorder %s12, 1
      %p58 = scmp.ne.s32.totalorder %s53, %s55
      %p59 = scmp.eq.s32.totalorder %s12, 0
      %p60 = por %p58, %p59
      %p61 = scmp.ne.s32.totalorder %s53, %s55
      %p62 = scmp.eq.s32.totalorder %s17, 1
      %p63 = por %p61, %p62
      %p64 = scmp.ne.s32.totalorder %s55, %s56
      %p65 = scmp.eq.s32.totalorder %s17, 0
      %p66 = por %p64, %p65
      %p67 = scmp.ne.s32.totalorder %s55, %s56
      %p68 = scmp.eq.s32.totalorder %s18, 1
      %p69 = por %p67, %p68
      %p71 = scmp.ne.s32.totalorder %s56, %s70
      %p72 = scmp.eq.s32.totalorder %s18, 0
      %p73 = por %p71, %p72
      %s74 = ssub.s32 %s19, %s31
      %s75 = ssub.s32 %s20, %s27
      %s76 = sor.u32 %s74, %s75
      %p77 = scmp.eq.s32.totalorder %s76, 0
      %s79 = sadd.s32 %s78, 1
      %s80 = scalar_select %p77, %s78, %s79
      %p83 = pneg %p77
      %p84 = scmp.eq.s32.totalorder %s12, 1
      %p85 = por %p83, %p84
      %p86 = scmp.ne.s32.totalorder %s78, %s81
      %p87 = scmp.eq.s32.totalorder %s12, 0
      %p88 = por %p86, %p87
      %p89 = scmp.ne.s32.totalorder %s78, %s81
      %p90 = scmp.eq.s32.totalorder %s17, 1
      %p91 = por %p89, %p90
      %p92 = scmp.ne.s32.totalorder %s81, %s82
      %p93 = scmp.eq.s32.totalorder %s17, 0
      %p94 = por %p92, %p93
      %p95 = scmp.ne.s32.totalorder %s81, %s82
      %p96 = scmp.eq.s32.totalorder %s18, 1
      %p97 = por %p95, %p96
      %p99 = scmp.ne.s32.totalorder %s82, %s98
      %p100 = scmp.eq.s32.totalorder %s18, 0
      %p101 = por %p99, %p100
      %p102 = scmp.le.s32.totalorder 1, %s12
      %p103 = scmp.lt.s32.totalorder %s12, 3
      %p104 = pnand %p102, %p103
      %p105 = pneg %p104
      // Predicated region
      $region9: #{tpu_custom_call.1} parent=5 // pred_check
        _
      $region10: #{tpu_custom_call.1} parent=5 // pred_check_branch
        %107 = sbr.rel (%p104) target = $region12
      $region11: #{tpu_custom_call.1} parent=5 // pred_region
        %s108 = ssub.s32 %s12, 1
        // Predicated region
        $region13: #{tpu_custom_call.1} parent=11 // pred_check
          %p109 = pneg %p45
        $region14: #{tpu_custom_call.1} parent=11 // pred_check_branch
          %111 = sbr.rel (%p109) target = $region16
        $region15: #{tpu_custom_call.1} parent=11 // pred_region
          %s113 = ssub.s32 16, 16
          %114 = vsyncadd [#allocation3], %s113
          %s116 = sshll.u32 [#allocation2], 4
          %s117 = int_to_ptr.vmem [resolvable:$true] %s116
          %119 = dma.hbm_to_vmem [thread:$0]  %s0, 16, %s117, [#allocation3]
        $region16: #{tpu_custom_call.1} parent=11 // pred_fallthru
          _
        // Predicated region
        $region17: #{tpu_custom_call.1} parent=11 // pred_check
          %p120 = pneg %p66
        $region18: #{tpu_custom_call.1} parent=11 // pred_check_branch
          %122 = sbr.rel (%p120) target = $region20
        $region19: #{tpu_custom_call.1} parent=11 // pred_region
          _
        $region20: #{tpu_custom_call.1} parent=11 // pred_fallthru
          _
      $region12: #{tpu_custom_call.1} parent=5 // pred_fallthru
        _
      %p123 = scmp.lt.s32.totalorder %s12, 2
      // Predicated region
      $region21: #{tpu_custom_call.1} parent=5 // pred_check
        %p124 = pneg %p123
      $region22: #{tpu_custom_call.1} parent=5 // pred_check_branch
        %126 = sbr.rel (%p124) target = $region24
      $region23: #{tpu_custom_call.1} parent=5 // pred_region
        _
      $region24: #{tpu_custom_call.1} parent=5 // pred_fallthru
        _
      %p127 = scmp.le.s32.totalorder 1, %s12
      %p128 = scmp.lt.s32.totalorder %s12, 3
      %p129 = pnand %p127, %p128
      %p130 = pneg %p129
      // Predicated region
      $region25: #{tpu_custom_call.1} parent=5 // pred_check
        _
      $region26: #{tpu_custom_call.1} parent=5 // pred_check_branch
        %132 = sbr.rel (%p129) target = $region28
      $region27: #{tpu_custom_call.1} parent=5 // pred_region
        %s133 = ssub.s32 %s12, 1
        // Predicated region
        $region29: #{tpu_custom_call.1} parent=27 // pred_check
          %p134 = pneg %p45
        $region30: #{tpu_custom_call.1} parent=27 // pred_check_branch
          %136 = sbr.rel (%p134) target = $region32
        $region31: #{tpu_custom_call.1} parent=27 // pred_region
          %137 = dma.done [#allocation3], 16
        $region32: #{tpu_custom_call.1} parent=27 // pred_fallthru
          _
        %p138 = pneg %p45
        %p139 = pneg %p42
        %p140 = pneg %p66
        %p141 = pneg %p63
        %p142 = pneg %p94
        %p143 = pneg %p91
        %s144 = sand.u32 %s81, 1
        %s145 = scalar_lea.sflag [#allocation4], %s144
        %s146 = sand.u32 %s81, 1
        %s147 = smul.addr %s146, 16
        %s148 = scalar_lea.vmem [#allocation5], %s147
        %s149 = smul.u32 2, %s22
        %s150 = smul.u32 %s22, 16
        %v151 = vlaneseq
        %v152 = vshrl.u32 %v151, 7
        %v153 = vadd.s32 %v152, 8
        %v154 = vstv %s150
        %v155 = vadd.s32 %v152, %v154
        %v156 = vadd.s32 %v153, %v154
        %v157 = vcvt.s32.f32 %v155
        %v158 = vcvt.s32.f32 %v156
        %v159 = vld [vmem:[#allocation2] sm:$0x1]
        %v161 = vlaneseq
        %v162 = vshrl.u32 %v161, 7
        %v163 = vsub.s32 0, %v162
        %v164 = vrot.slane %v159, %v163
        %v166 = vmul.f32 %v157, %v164
        %v167 = vmul.f32 %v158, %v164
        %v168 = vld [vmem:[%s1] sm:$0x1]
        %v170 = vlaneseq
        %v171 = vshrl.u32 %v170, 7
        %v172 = vsub.s32 0, %v171
        %v173 = vrot.slane %v168, %v172
        %v175 = vadd.f32 %v166, %v173
        %v176 = vadd.f32 %v167, %v173
        %v177 = vand.u32 2147483647, %v175
        %vm178 = vcmp.le.f32.partialorder %v177, 0.7853982
        %vm179 = vcmp.lt.s32.totalorder %v175, 0
        %v180 = vand.u32 %v175, 2139095040
        %v181 = vshrl.u32 %v180, 23
        %v182 = vsub.s32 %v181, 127
        %v183 = vand.u32 2147483647, %v175
        %v184 = vand.u32 %v183, 8388607
        %v185 = vor.u32 %v184, 8388608
        %v186 = vsub.s32 0, %v185
        %v187 = vadd.s32 %v182, 1
        %vm188 = vcmp.gt.s32.totalorder %v187, 0
        %v189 = vsel %vm188, %v187, 0
        %v190 = vshrl.u32 %v189, 5
        %v191 = vand.u32 %v189, 31
        %v192 = vsub.s32 32, %v191
        %v193 = vshrl.u32 683565275, %v192
        %v194 = vshll.u32 683565275, %v191
        %v195 = vshrl.u32 2475754826, %v192
        %v196 = vor.u32 %v194, %v195
        %v197 = vshll.u32 2475754826, %v191
        %v198 = vshrl.u32 2131351028, %v192
        %v199 = vor.u32 %v197, %v198
        %v200 = vshll.u32 2131351028, %v191
        %v201 = vshrl.u32 2102212464, %v192
        %v202 = vor.u32 %v200, %v201
        %v203 = vshll.u32 2102212464, %v191
        %v204 = vshrl.u32 920167782, %v192
        %v205 = vor.u32 %v203, %v204
        %v206 = vshll.u32 920167782, %v191
        %v207 = vshrl.u32 1326507024, %v192
        %v208 = vor.u32 %v206, %v207
        %vm209 = vcmp.lt.s32.totalorder %v190, 1
        %vm210 = vcmp.lt.s32.totalorder %v190, 2
        %vm211 = vcmp.lt.s32.totalorder %v190, 3
        %vm212 = vcmp.lt.s32.totalorder %v190, 4
        %v213 = vsel %vm209, %v193, %v196
        %v214 = vsel %vm212, %v202, 2102212464
        %v215 = vsel %vm211, %v199, %v214
        %v216 = vsel %vm210, %v213, %v215
        %v217 = vsel %vm209, %v196, %v199
        %v218 = vsel %vm212, %v205, 920167782
        %v219 = vsel %vm211, %v202, %v218
        %v220 = vsel %vm210, %v217, %v219
        %v221 = vsel %vm209, %v199, %v202
        %v222 = vsel %vm212, %v208, 1326507024
        %v223 = vsel %vm211, %v205, %v222
        %v224 = vsel %vm210, %v221, %v223
        %v225 = vshll.u32 %v185, 8
        %v226 = vmul.u32.u64.compose %v225, %v224
        %v227 = vextract.low.u32 %v226
        %v228 = vextract.high.u32 %v226
        %v229 = vmul.u32.u64.compose %v225, %v220
        %v230 = vextract.low.u32 %v229
        %v231 = vextract.high.u32 %v229
        %v232 = vmul.u32 %v225, %v216
        %v233 = vadd.s32 %v228, %v230
        %vm234 = vc.u32 %v228, %v230
        %v235 = vadd.s32 %v231, 1
        %v236 = vsel %vm234, %v235, %v231
        %v237 = vadd.s32 %v232, %v236
        %v238 = vadd.s32 %v237, 536870912
        %v239 = vshrl.u32 %v238, 30
        %v240 = vshll.u32 %v239, 30
        %v241 = vsub.s32 %v237, %v240
        %vm242 = vcmp.lt.s32.totalorder %v241, 0
        %v243 = vsub.s32 0, %v241
        %v244 = vsel %vm242, %v243, %v241
        %v245 = vclz %v244
        %v246 = vsub.s32 %v245, 2
        %vm247 = vcmp.gt.s32.totalorder 0, %v246
        %v248 = vsel %vm247, 0, %v246
        %v249 = vsub.s32 32, %v248
        %v250 = vshll.u32 %v241, %v248
        %v251 = vshrl.u32 %v233, %v249
        %v252 = vor.u32 %v250, %v251
        %v253 = vsub.s32 4294967266, %v248
        %v254 = vadd.s32 %v253, 127
        %v255 = vshll.u32 %v254, 23
        %v256 = vor.u32 4788187, %v255
        %v257 = vand.u32 2147483647, %v256
        %v259 = vcvt.s32.f32 %v252
        %v260 = vmul.f32 %v259, %v257
        %v261 = vxor.u32 %v260, 2147483648
        %v262 = vsel %vm179, %v261, %v260
        %v263 = vsub.s32 4, %v239
        %v264 = vsel %vm179, %v263, %v239
        %v265 = vsel %vm178, %v175, %v262
        %v266 = vsel %vm178, 0, %v264
        %v267 = vcosq.f32.pop %v265
        %v268 = vsinq.f32.pop %v265
        %vm269 = vweird.f32 %v175
        %v270 = vadd.s32 %v266, 3
        %v271 = vand.u32 %v270, 3
        %vm272 = vcmp.lt.s32.totalorder %v271, 2
        %vm273 = vcmp.eq.s32.totalorder %v271, 0
        %v274 = vxor.u32 %v268, 2147483648
        %v275 = vsel %vm273, %v267, %v274
        %vm276 = vcmp.eq.s32.totalorder %v271, 2
        %v277 = vxor.u32 %v267, 2147483648
        %v278 = vsel %vm276, %v277, %v268
        %v279 = vsel %vm272, %v275, %v278
        %v280 = vsel %vm269, nan, %v279
        %v281 = vand.u32 2147483647, %v176
        %vm282 = vcmp.le.f32.partialorder %v281, 0.7853982
        %vm283 = vcmp.lt.s32.totalorder %v176, 0
        %v284 = vand.u32 %v176, 2139095040
        %v285 = vshrl.u32 %v284, 23
        %v286 = vsub.s32 %v285, 127
        %v287 = vand.u32 2147483647, %v176
        %v288 = vand.u32 %v287, 8388607
        %v289 = vor.u32 %v288, 8388608
        %v290 = vsub.s32 0, %v289
        %v291 = vadd.s32 %v286, 1
        %vm292 = vcmp.gt.s32.totalorder %v291, 0
        %v293 = vsel %vm292, %v291, 0
        %v294 = vshrl.u32 %v293, 5
        %v295 = vand.u32 %v293, 31
        %v296 = vsub.s32 32, %v295
        %v297 = vshrl.u32 683565275, %v296
        %v298 = vshll.u32 683565275, %v295
        %v299 = vshrl.u32 2475754826, %v296
        %v300 = vor.u32 %v298, %v299
        %v301 = vshll.u32 2475754826, %v295
        %v302 = vshrl.u32 2131351028, %v296
        %v303 = vor.u32 %v301, %v302
        %v304 = vshll.u32 2131351028, %v295
        %v305 = vshrl.u32 2102212464, %v296
        %v306 = vor.u32 %v304, %v305
        %v307 = vshll.u32 2102212464, %v295
        %v308 = vshrl.u32 920167782, %v296
        %v309 = vor.u32 %v307, %v308
        %v310 = vshll.u32 920167782, %v295
        %v311 = vshrl.u32 1326507024, %v296
        %v312 = vor.u32 %v310, %v311
        %vm313 = vcmp.lt.s32.totalorder %v294, 1
        %vm314 = vcmp.lt.s32.totalorder %v294, 2
        %vm315 = vcmp.lt.s32.totalorder %v294, 3
        %vm316 = vcmp.lt.s32.totalorder %v294, 4
        %v317 = vsel %vm313, %v297, %v300
        %v318 = vsel %vm316, %v306, 2102212464
        %v319 = vsel %vm315, %v303, %v318
        %v320 = vsel %vm314, %v317, %v319
        %v321 = vsel %vm313, %v300, %v303
        %v322 = vsel %vm316, %v309, 920167782
        %v323 = vsel %vm315, %v306, %v322
        %v324 = vsel %vm314, %v321, %v323
        %v325 = vsel %vm313, %v303, %v306
        %v326 = vsel %vm316, %v312, 1326507024
        %v327 = vsel %vm315, %v309, %v326
        %v328 = vsel %vm314, %v325, %v327
        %v329 = vshll.u32 %v289, 8
        %v330 = vmul.u32.u64.compose %v329, %v328
        %v331 = vextract.low.u32 %v330
        %v332 = vextract.high.u32 %v330
        %v333 = vmul.u32.u64.compose %v329, %v324
        %v334 = vextract.low.u32 %v333
        %v335 = vextract.high.u32 %v333
        %v336 = vmul.u32 %v329, %v320
        %v337 = vadd.s32 %v332, %v334
        %vm338 = vc.u32 %v332, %v334
        %v339 = vadd.s32 %v335, 1
        %v340 = vsel %vm338, %v339, %v335
        %v341 = vadd.s32 %v336, %v340
        %v342 = vadd.s32 %v341, 536870912
        %v343 = vshrl.u32 %v342, 30
        %v344 = vshll.u32 %v343, 30
        %v345 = vsub.s32 %v341, %v344
        %vm346 = vcmp.lt.s32.totalorder %v345, 0
        %v347 = vsub.s32 0, %v345
        %v348 = vsel %vm346, %v347, %v345
        %v349 = vclz %v348
        %v350 = vsub.s32 %v349, 2
        %vm351 = vcmp.gt.s32.totalorder 0, %v350
        %v352 = vsel %vm351, 0, %v350
        %v353 = vsub.s32 32, %v352
        %v354 = vshll.u32 %v345, %v352
        %v355 = vshrl.u32 %v337, %v353
        %v356 = vor.u32 %v354, %v355
        %v357 = vsub.s32 4294967266, %v352
        %v358 = vadd.s32 %v357, 127
        %v359 = vshll.u32 %v358, 23
        %v360 = vor.u32 4788187, %v359
        %v361 = vand.u32 2147483647, %v360
        %v363 = vcvt.s32.f32 %v356
        %v364 = vmul.f32 %v363, %v361
        %v365 = vxor.u32 %v364, 2147483648
        %v366 = vsel %vm283, %v365, %v364
        %v367 = vsub.s32 4, %v343
        %v368 = vsel %vm283, %v367, %v343
        %v369 = vsel %vm282, %v176, %v366
        %v370 = vsel %vm282, 0, %v368
        %v371 = vcosq.f32.pop %v369
        %v372 = vsinq.f32.pop %v369
        %vm373 = vweird.f32 %v176
        %v374 = vadd.s32 %v370, 3
        %v375 = vand.u32 %v374, 3
        %vm376 = vcmp.lt.s32.totalorder %v375, 2
        %vm377 = vcmp.eq.s32.totalorder %v375, 0
        %v378 = vxor.u32 %v372, 2147483648
        %v379 = vsel %vm377, %v371, %v378
        %vm380 = vcmp.eq.s32.totalorder %v375, 2
        %v381 = vxor.u32 %v371, 2147483648
        %v382 = vsel %vm380, %v381, %v372
        %v383 = vsel %vm376, %v379, %v382
        %v384 = vsel %vm373, nan, %v383
        %385 = vst [vmem:[%s148] sm:$0xff] %v280
        %386 = vst [vmem:[%s148 + $0x8] sm:$0xff] %v384
        %s387 = sand.u32 %s81, 1
        %s388 = scalar_lea.sflag [#allocation4], %s387
        %s389 = sand.u32 %s81, 1
        %s390 = smul.addr %s389, 16
        %s391 = scalar_lea.vmem [#allocation5], %s390
        // Predicated region
        $region33: #{tpu_custom_call.1} parent=27 // pred_check
          %p392 = pneg %p91
        $region34: #{tpu_custom_call.1} parent=27 // pred_check_branch
          %394 = sbr.rel (%p392) target = $region36
        $region35: #{tpu_custom_call.1} parent=27 // pred_region
          %s395 = smul.u32 2, %s22
          %s397 = ssub.s32 256, 256
          %398 = vsyncadd %s388, %s397
          %s399 = smul.addr %s21, 2
          %s400 = sadd.s32 %s395, %s399
          %s401 = smul.addr %s400, 128
          %s402 = scalar_lea.hbm %s2, %s401
          %s403 = sshll.u32 %s391, 4
          %s404 = int_to_ptr.vmem [resolvable:$true] %s403
          %409 = dma.vmem_to_hbm [thread:$0]  %s404, 256, %s402, %s388, 128, 128, 8
        $region36: #{tpu_custom_call.1} parent=27 // pred_fallthru
          _
      $region28: #{tpu_custom_call.1} parent=5 // pred_fallthru
        _
      %p410 = scmp.le.s32.totalorder 2, %s12
      // Predicated region
      $region37: #{tpu_custom_call.1} parent=5 // pred_check
        %p411 = pneg %p410
      $region38: #{tpu_custom_call.1} parent=5 // pred_check_branch
        %413 = sbr.rel (%p411) target = $region40
      $region39: #{tpu_custom_call.1} parent=5 // pred_region
        %s414 = ssub.s32 %s12, 2
        // Predicated region
        $region41: #{tpu_custom_call.1} parent=39 // pred_check
          %p415 = pneg %p97
        $region42: #{tpu_custom_call.1} parent=39 // pred_check_branch
          %417 = sbr.rel (%p415) target = $region44
        $region43: #{tpu_custom_call.1} parent=39 // pred_region
          %s418 = sand.u32 %s82, 1
          %s419 = scalar_lea.sflag [#allocation4], %s418
          %s420 = sand.u32 %s82, 1
          %s421 = smul.addr %s420, 16
          %s422 = scalar_lea.vmem [#allocation5], %s421
          %423 = dma.done %s419, 256
        $region44: #{tpu_custom_call.1} parent=39 // pred_fallthru
          _
      $region40: #{tpu_custom_call.1} parent=5 // pred_fallthru
        _
    $region6: #{tpu_custom_call.1} parent=1 // loop_footer
      %s16 = sadd.s32 1, %s12
    $region7: #{tpu_custom_call.1} parent=1 // loop_footer_branch
      %11 = sbr.rel target = $region3
    $region8: #{tpu_custom_call.1} parent=1 // loop_exit
      _
    %424 = vsyncpa [#allocation3], 1
    %s425 = scalar_lea.sflag [#allocation3], 1
    %426 = vsyncpa %s425, 1
    %427 = vsyncpa [#allocation4], 1
    %s428 = scalar_lea.sflag [#allocation4], 1
    %429 = vsyncpa %s428, 1

</llo_original>
